<compile_context>
chip_gen: v5e
topology: v5e:2x2
jax: 0.10.0
libtpu: 0.0.40
codegen_flags: <defaults>
</compile_context>

<pallas_src>
import functools

import jax
import jax.numpy as jnp
from jax.experimental import pallas as pl
from jax.experimental.pallas import tpu as pltpu

_LANES = 128      # padded feature width for every layer (all dims <= 128 here)
_N_LAYERS = 4     # fc1, fc2, fc3, fused head [act | val]


def _mlp_kernel(x_ref, w_ref, b_ref, out_ref):
    """One batch tile through the whole MLP.

    Every layer is zero-padded to 128 lanes, so padding rows/columns contribute
    exactly 0 (and relu keeps them 0) -- no masking needed anywhere.
    """
    def layer(h, l):
        return (jnp.dot(h, w_ref[l], preferred_element_type=jnp.float32)
                + b_ref[l])                       # b_ref[l] is (1, 128), broadcasts

    h = x_ref[...]                                 # (B_TILE, 128) f32
    h = jnp.maximum(layer(h, 0), 0.0)              # fc1 + relu
    h = jnp.maximum(layer(h, 1), 0.0)              # fc2 + relu
    h = jnp.maximum(layer(h, 2), 0.0)              # fc3 + relu
    out_ref[...] = layer(h, 3).astype(out_ref.dtype)   # fused act|val head


def pack_params(params):
    """Pack the 5 (W, b) pairs into two lane-padded slabs.

    w_slab: (4, 128, 128) f32; layer l occupies [:d_in_l, :d_out_l].
    b_slab: (4, 1, 128)   f32.
    Layer 3 is the fused head [W_act | W_val]: output columns
    [0:n_actions] = act, [n_actions] = val.
    """
    (w1, b1), (w2, b2), (w3, b3), (wa, ba), (wv, bv) = params
    wh = jnp.concatenate([wa, wv], axis=1)
    bh = jnp.concatenate([ba, bv], axis=1)
    ws = (w1, w2, w3, wh)
    bs = (b1, b2, b3, bh)

    w_slab = jnp.zeros((_N_LAYERS, _LANES, _LANES), jnp.float32)
    b_slab = jnp.zeros((_N_LAYERS, 1, _LANES), jnp.float32)
    for l, (w, b) in enumerate(zip(ws, bs)):
        d_in, d_out = w.shape
        assert d_in <= _LANES and d_out <= _LANES, "layer wider than 128 lanes"
        w_slab = w_slab.at[l, :d_in, :d_out].set(w.astype(jnp.float32))
        b_slab = b_slab.at[l, :, :d_out].set(b.astype(jnp.float32))
    return w_slab, b_slab


@functools.partial(jax.jit, static_argnames=("n_actions", "b_tile"))
def neuro_missile_net_forward(x, w_slab, b_slab, *, n_actions, b_tile=256):
    """Fused MLP forward. x: (B, state_env_shape) float32.

    Returns (val, act) matching the PyTorch module's forward().
    """
    B, d_in = x.shape
    assert d_in <= _LANES

    # Batch tile: multiple of 8 sublanes; small batches collapse to one tile.
    bt = min(b_tile, max(8, pl.cdiv(B, 8) * 8))
    bt = pl.cdiv(bt, 8) * 8
    b_pad = pl.cdiv(B, bt) * bt

    # Zero-pad batch rows and feature lanes (padding is inert through the net).
    x_pad = jnp.pad(x.astype(jnp.float32),
                    ((0, b_pad - B), (0, _LANES - d_in)))

    out = pl.pallas_call(
        _mlp_kernel,
        out_shape=jax.ShapeDtypeStruct((b_pad, _LANES), jnp.float32),
        grid=(b_pad // bt,),
        in_specs=[
            # activations: one tile of the batch per grid step
            pl.BlockSpec((bt, _LANES), lambda i: (i, 0)),
            # packed weights / biases: same block every step -> VMEM-resident
            pl.BlockSpec((_N_LAYERS, _LANES, _LANES), lambda i: (0, 0, 0)),
            pl.BlockSpec((_N_LAYERS, 1, _LANES), lambda i: (0, 0, 0)),
        ],
        out_specs=pl.BlockSpec((bt, _LANES), lambda i: (i, 0)),
        compiler_params=pltpu.CompilerParams(
            dimension_semantics=("parallel",)),
    )(x_pad, w_slab, b_slab)

    act = out[:B, :n_actions]
    val = out[:B, n_actions:n_actions + 1]
    return val, act


def init_params(key, state_env_shape, n_actions, fc1=32, fc2=64, fc3=32):
    """Deterministic synthetic init (PyTorch-Linear-like uniform fan-in).

    Weights are stored pre-transposed as (in, out); biases as (1, out).
    """
    dims = [(state_env_shape, fc1), (fc1, fc2), (fc2, fc3),
            (fc3, n_actions), (fc3, 1)]
    params = []
    for (d_in, d_out) in dims:
        key, kw, kb = jax.random.split(key, 3)
        bound = 1.0 / jnp.sqrt(d_in)
        w = jax.random.uniform(kw, (d_in, d_out), jnp.float32, -bound, bound)
        b = jax.random.uniform(kb, (1, d_out), jnp.float32, -bound, bound)
        params.append((w, b))
    return params


def _reference_forward(x, params):
    (w1, b1), (w2, b2), (w3, b3), (wa, ba), (wv, bv) = params
    h = jnp.maximum(x @ w1 + b1, 0.0)
    h = jnp.maximum(h @ w2 + b2, 0.0)
    h = jnp.maximum(h @ w3 + b3, 0.0)
    return h @ wv + bv, h @ wa + ba


if __name__ == "__main__":
    key = jax.random.PRNGKey(0)

    batch = 2
    state_env_shape = 16
    n_actions = 4

    key, kx = jax.random.split(key)
    x = jax.random.normal(kx, (batch, state_env_shape), jnp.float32)

    params = init_params(key, state_env_shape, n_actions)
    w_slab, b_slab = pack_params(params)

    val, act = neuro_missile_net_forward(x, w_slab, b_slab, n_actions=n_actions)
    val, act = jax.block_until_ready((val, act))

    ref_val, ref_act = _reference_forward(x, params)
    assert val.shape == (batch, 1) and act.shape == (batch, n_actions)
    assert jnp.allclose(val, ref_val, atol=1e-5, rtol=1e-5)
    assert jnp.allclose(act, ref_act, atol=1e-5, rtol=1e-5)

    # Also exercise the gridded / padded-batch path (multiple batch tiles).
    key, kx2 = jax.random.split(key)
    x_big = jax.random.normal(kx2, (260, state_env_shape), jnp.float32)
    val_b, act_b = jax.block_until_ready(
        neuro_missile_net_forward(x_big, w_slab, b_slab, n_actions=n_actions))
    ref_val_b, ref_act_b = _reference_forward(x_big, params)
    assert jnp.allclose(val_b, ref_val_b, atol=1e-4, rtol=1e-4)
    assert jnp.allclose(act_b, ref_act_b, atol=1e-4, rtol=1e-4)

    print("KERNEL_OK")
</pallas_src>

<mosaic_0001>
module attributes {stable_mosaic.version = 11 : i64} {
  func.func @_mlp_kernel(%arg0: i32, %arg1: memref<8x128xf32, #tpu.memory_space<vmem>>, %arg2: memref<4x128x128xf32, #tpu.memory_space<vmem>>, %arg3: memref<4x1x128xf32, #tpu.memory_space<vmem>>, %arg4: memref<8x128xf32, #tpu.memory_space<vmem>>) attributes {dimension_semantics = [#tpu.dimension_semantics<parallel>], iteration_bounds = array<i64: 1>, scalar_prefetch = 0 : i64, scratch_operands = 0 : i64, tpu.core_type = #tpu.core_type<tc>, window_params = [{transform_indices = @transform_0, window_bounds = array<i64: 8, 128>}, {pipeline_mode = #tpu.pipeline_mode<synchronous>, transform_indices = @transform_1, window_bounds = array<i64: 4, 128, 128>}, {pipeline_mode = #tpu.pipeline_mode<synchronous>, transform_indices = @transform_2, window_bounds = array<i64: 4, 1, 128>}, {transform_indices = @transform_3, window_bounds = array<i64: 8, 128>}]} {
    %c0 = arith.constant 0 : index
    %c0_0 = arith.constant 0 : index
    %0 = vector.load %arg1[%c0, %c0_0] : memref<8x128xf32, #tpu.memory_space<vmem>>, vector<8x128xf32>
    %c0_1 = arith.constant 0 : index
    %c0_2 = arith.constant 0 : index
    %c0_3 = arith.constant 0 : index
    %1 = vector.load %arg2[%c0_1, %c0_2, %c0_3] : memref<4x128x128xf32, #tpu.memory_space<vmem>>, vector<1x128x128xf32>
    %2 = vector.shape_cast %1 : vector<1x128x128xf32> to vector<128x128xf32>
    %cst = arith.constant dense<0.000000e+00> : vector<8x128xf32>
    %3 = tpu.matmul %0, %2, %cst {dimension_numbers = #tpu.dot_dimension_numbers<[1], [0], [0], [1], [0, 0, 1, 1], [], []>} : vector<8x128xf32>, vector<128x128xf32>, vector<8x128xf32> -> vector<8x128xf32>
    %c0_4 = arith.constant 0 : index
    %c0_5 = arith.constant 0 : index
    %c0_6 = arith.constant 0 : index
    %4 = vector.load %arg3[%c0_4, %c0_5, %c0_6] : memref<4x1x128xf32, #tpu.memory_space<vmem>>, vector<1x1x128xf32>
    %5 = vector.shape_cast %4 : vector<1x1x128xf32> to vector<1x128xf32>
    %6 = vector.broadcast %5 : vector<1x128xf32> to vector<8x128xf32>
    %7 = arith.addf %3, %6 : vector<8x128xf32>
    %cst_7 = arith.constant 0.000000e+00 : f32
    %8 = vector.broadcast %cst_7 : f32 to vector<8x128xf32>
    %9 = arith.maximumf %7, %8 : vector<8x128xf32>
    %c1 = arith.constant 1 : index
    %c0_8 = arith.constant 0 : index
    %c0_9 = arith.constant 0 : index
    %10 = vector.load %arg2[%c1, %c0_8, %c0_9] : memref<4x128x128xf32, #tpu.memory_space<vmem>>, vector<1x128x128xf32>
    %11 = vector.shape_cast %10 : vector<1x128x128xf32> to vector<128x128xf32>
    %cst_10 = arith.constant dense<0.000000e+00> : vector<8x128xf32>
    %12 = tpu.matmul %9, %11, %cst_10 {dimension_numbers = #tpu.dot_dimension_numbers<[1], [0], [0], [1], [0, 0, 1, 1], [], []>} : vector<8x128xf32>, vector<128x128xf32>, vector<8x128xf32> -> vector<8x128xf32>
    %c1_11 = arith.constant 1 : index
    %c0_12 = arith.constant 0 : index
    %c0_13 = arith.constant 0 : index
    %13 = vector.load %arg3[%c1_11, %c0_12, %c0_13] : memref<4x1x128xf32, #tpu.memory_space<vmem>>, vector<1x1x128xf32>
    %14 = vector.shape_cast %13 : vector<1x1x128xf32> to vector<1x128xf32>
    %15 = vector.broadcast %14 : vector<1x128xf32> to vector<8x128xf32>
    %16 = arith.addf %12, %15 : vector<8x128xf32>
    %cst_14 = arith.constant 0.000000e+00 : f32
    %17 = vector.broadcast %cst_14 : f32 to vector<8x128xf32>
    %18 = arith.maximumf %16, %17 : vector<8x128xf32>
    %c2 = arith.constant 2 : index
    %c0_15 = arith.constant 0 : index
    %c0_16 = arith.constant 0 : index
    %19 = vector.load %arg2[%c2, %c0_15, %c0_16] : memref<4x128x128xf32, #tpu.memory_space<vmem>>, vector<1x128x128xf32>
    %20 = vector.shape_cast %19 : vector<1x128x128xf32> to vector<128x128xf32>
    %cst_17 = arith.constant dense<0.000000e+00> : vector<8x128xf32>
    %21 = tpu.matmul %18, %20, %cst_17 {dimension_numbers = #tpu.dot_dimension_numbers<[1], [0], [0], [1], [0, 0, 1, 1], [], []>} : vector<8x128xf32>, vector<128x128xf32>, vector<8x128xf32> -> vector<8x128xf32>
    %c2_18 = arith.constant 2 : index
    %c0_19 = arith.constant 0 : index
    %c0_20 = arith.constant 0 : index
    %22 = vector.load %arg3[%c2_18, %c0_19, %c0_20] : memref<4x1x128xf32, #tpu.memory_space<vmem>>, vector<1x1x128xf32>
    %23 = vector.shape_cast %22 : vector<1x1x128xf32> to vector<1x128xf32>
    %24 = vector.broadcast %23 : vector<1x128xf32> to vector<8x128xf32>
    %25 = arith.addf %21, %24 : vector<8x128xf32>
    %cst_21 = arith.constant 0.000000e+00 : f32
    %26 = vector.broadcast %cst_21 : f32 to vector<8x128xf32>
    %27 = arith.maximumf %25, %26 : vector<8x128xf32>
    %c3 = arith.constant 3 : index
    %c0_22 = arith.constant 0 : index
    %c0_23 = arith.constant 0 : index
    %28 = vector.load %arg2[%c3, %c0_22, %c0_23] : memref<4x128x128xf32, #tpu.memory_space<vmem>>, vector<1x128x128xf32>
    %29 = vector.shape_cast %28 : vector<1x128x128xf32> to vector<128x128xf32>
    %cst_24 = arith.constant dense<0.000000e+00> : vector<8x128xf32>
    %30 = tpu.matmul %27, %29, %cst_24 {dimension_numbers = #tpu.dot_dimension_numbers<[1], [0], [0], [1], [0, 0, 1, 1], [], []>} : vector<8x128xf32>, vector<128x128xf32>, vector<8x128xf32> -> vector<8x128xf32>
    %c3_25 = arith.constant 3 : index
    %c0_26 = arith.constant 0 : index
    %c0_27 = arith.constant 0 : index
    %31 = vector.load %arg3[%c3_25, %c0_26, %c0_27] : memref<4x1x128xf32, #tpu.memory_space<vmem>>, vector<1x1x128xf32>
    %32 = vector.shape_cast %31 : vector<1x1x128xf32> to vector<1x128xf32>
    %33 = vector.broadcast %32 : vector<1x128xf32> to vector<8x128xf32>
    %34 = arith.addf %30, %33 : vector<8x128xf32>
    %c0_28 = arith.constant 0 : index
    %c0_29 = arith.constant 0 : index
    %35 = vector.load %arg4[%c0_28, %c0_29] : memref<8x128xf32, #tpu.memory_space<vmem>>, vector<8x128xf32>
    tpu.vector_store %arg4[%c0_28, %c0_29], %34 {strides = array<i32>} : memref<8x128xf32, #tpu.memory_space<vmem>>, vector<8x128xf32>,
    return
  }
  func.func @transform_0(%arg0: i32) -> (i32, i32) {
    %c0_i32 = arith.constant 0 : i32
    %c0_i32_0 = arith.constant 0 : i32
    return %arg0, %c0_i32 : i32, i32
  }
  func.func @transform_1(%arg0: i32) -> (i32, i32, i32) {
    %c0_i32 = arith.constant 0 : i32
    %c0_i32_0 = arith.constant 0 : i32
    %c0_i32_1 = arith.constant 0 : i32
    %c0_i32_2 = arith.constant 0 : i32
    return %c0_i32, %c0_i32_0, %c0_i32_1 : i32, i32, i32
  }
  func.func @transform_2(%arg0: i32) -> (i32, i32, i32) {
    %c0_i32 = arith.constant 0 : i32
    %c0_i32_0 = arith.constant 0 : i32
    %c0_i32_1 = arith.constant 0 : i32
    %c0_i32_2 = arith.constant 0 : i32
    return %c0_i32, %c0_i32_0, %c0_i32_1 : i32, i32, i32
  }
  func.func @transform_3(%arg0: i32) -> (i32, i32) {
    %c0_i32 = arith.constant 0 : i32
    %c0_i32_0 = arith.constant 0 : i32
    return %arg0, %c0_i32 : i32, i32
  }
}

</mosaic_0001>

<llo_original>
// kernel: neuro_missile_net_forward.1
$region0: #{neuro_missile_net_forward.1}
  #allocation0 [shape = 'u32[]', space=smem, size = 0x4, offset = 0x4, fixed_abs, tag = 'smem constant byte address 0x4 - core index']
  #allocation1 [shape = 'u32[72,128]{1,0:T(1,128)}', space=vmem, size = 0x9000, scoped, tag = 'internal scratch']
  %s0 = inlined_call_operand.vmem [shape: f32[8,128], index: 0, kind: input, shape index: {}]
  %s1 = inlined_call_operand.hbm [shape: f32[4,128,128], index: 1, kind: input, shape index: {}]
  %s2 = inlined_call_operand.vmem [shape: f32[4,1,128], index: 2, kind: input, shape index: {}]
  %s3 = inlined_call_operand.vmem [shape: f32[8,128], index: 3, kind: output, shape index: {}]
  %s4 = sld [smem:[#allocation0]]
  $region26: #{neuro_missile_net_forward.1} parent=0
    _
  %s6 = ssub.s32 1, %s4
  %s7 = scalar_select 0, %s6, %s4
  $region1: #{neuro_missile_net_forward.1} parent=0
    #allocation2 [shape = 'u8[262144]{0}', space=vmem, size = 0x40000, scoped, tag = 'input window, operand 1, single buffered']
    #allocation3 [shape = 's32[1]{0}', space=sflag, size = 0x4, scoped, tag = 'scoped memory for neuro_missile_net_forward.1']
    %8 = vsyncpa [#allocation3], 0
    // Predicated region
    $region2: #{neuro_missile_net_forward.1} parent=1 // pred_check
      _
    $region3: #{neuro_missile_net_forward.1} parent=1 // pred_check_branch
      %10 = sbr.rel (0) target = $region5
    $region4: #{neuro_missile_net_forward.1} parent=1 // pred_region
      _
    $region5: #{neuro_missile_net_forward.1} parent=1 // pred_fallthru
      _
    // Predicated region
    $region6: #{neuro_missile_net_forward.1} parent=1 // pred_check
      _
    $region7: #{neuro_missile_net_forward.1} parent=1 // pred_check_branch
      %12 = sbr.rel (0) target = $region9
    $region8: #{neuro_missile_net_forward.1} parent=1 // pred_region
      %14 = vsyncadd [#allocation3], 0
      %s15 = sshll.u32 %s1, 4
      %s16 = int_to_ptr.hbm [resolvable:$true] %s15
      %s17 = sshll.u32 [#allocation2], 4
      %s18 = int_to_ptr.vmem [resolvable:$true] %s17
      %23 = dma.hbm_to_vmem [thread:$0]  %s16, 8192, %s18, [#allocation3], 128, 128, 8
    $region9: #{neuro_missile_net_forward.1} parent=1 // pred_fallthru
      _
    // Predicated region
    $region10: #{neuro_missile_net_forward.1} parent=1 // pred_check
      _
    $region11: #{neuro_missile_net_forward.1} parent=1 // pred_check_branch
      %25 = sbr.rel (0) target = $region13
    $region12: #{neuro_missile_net_forward.1} parent=1 // pred_region
      _
    $region13: #{neuro_missile_net_forward.1} parent=1 // pred_fallthru
      _
    // Predicated region
    $region14: #{neuro_missile_net_forward.1} parent=1 // pred_check
      _
    $region15: #{neuro_missile_net_forward.1} parent=1 // pred_check_branch
      %27 = sbr.rel (0) target = $region17
    $region16: #{neuro_missile_net_forward.1} parent=1 // pred_region
      %29 = dma.done [#allocation3], 8192
    $region17: #{neuro_missile_net_forward.1} parent=1 // pred_fallthru
      _
    %v30 = vld [vmem:[%s0] sm:$0xff]
    %v31 = vld [vmem:[#allocation2] sm:$0xff]
    %v32 = vld [vmem:[#allocation2 + $0x8] sm:$0xff]
    %v33 = vld [vmem:[#allocation2 + $0x10] sm:$0xff]
    %v34 = vld [vmem:[#allocation2 + $0x18] sm:$0xff]
    %v35 = vld [vmem:[#allocation2 + $0x20] sm:$0xff]
    %v36 = vld [vmem:[#allocation2 + $0x28] sm:$0xff]
    %v37 = vld [vmem:[#allocation2 + $0x30] sm:$0xff]
    %v38 = vld [vmem:[#allocation2 + $0x38] sm:$0xff]
    %v39 = vld [vmem:[#allocation2 + $0x40] sm:$0xff]
    %v40 = vld [vmem:[#allocation2 + $0x48] sm:$0xff]
    %v41 = vld [vmem:[#allocation2 + $0x50] sm:$0xff]
    %v42 = vld [vmem:[#allocation2 + $0x58] sm:$0xff]
    %v43 = vld [vmem:[#allocation2 + $0x60] sm:$0xff]
    %v44 = vld [vmem:[#allocation2 + $0x68] sm:$0xff]
    %v45 = vld [vmem:[#allocation2 + $0x70] sm:$0xff]
    %v46 = vld [vmem:[#allocation2 + $0x78] sm:$0xff]
    %v47 = vld [vmem:[%s2] sm:$0x1]
    %v49 = vperm.slane %v47, 0
    %51 = vmatpush.msra.mxu0 %v46
    %52 = vmatpush.msra.mxu0 %v45
    %53 = vmatpush.msra.mxu0 %v44
    %54 = vmatpush.msra.mxu0 %v43
    %55 = vmatpush.msra.mxu0 %v42
    %56 = vmatpush.msra.mxu0 %v41
    %57 = vmatpush.msra.mxu0 %v40
    %58 = vmatpush.msra.mxu0 %v39
    %59 = vmatpush.msra.mxu0 %v38
    %60 = vmatpush.msra.mxu0 %v37
    %61 = vmatpush.msra.mxu0 %v36
    %62 = vmatpush.msra.mxu0 %v35
    %63 = vmatpush.msra.mxu0 %v34
    %64 = vmatpush.msra.mxu0 %v33
    %65 = vmatpush.msra.mxu0 %v32
    %66 = vmatpush.msra.mxu0 %v31
    %67 = vmatmul.f32.gmra.mxu0 %v30
    %v68 = vpop.f32.mrf.mxu0
    %v69 = vadd.f32 %v49, %v68
    %70 = vdwg.mxu0
    %v71 = vmax.f32 %v69, 0.0
    %s72 = scalar_lea.vmem [#allocation2], 128
    %v73 = vld [vmem:[%s72] sm:$0xff]
    %v74 = vld [vmem:[%s72 + $0x8] sm:$0xff]
    %v75 = vld [vmem:[%s72 + $0x10] sm:$0xff]
    %v76 = vld [vmem:[%s72 + $0x18] sm:$0xff]
    %v77 = vld [vmem:[%s72 + $0x20] sm:$0xff]
    %v78 = vld [vmem:[%s72 + $0x28] sm:$0xff]
    %v79 = vld [vmem:[%s72 + $0x30] sm:$0xff]
    %v80 = vld [vmem:[%s72 + $0x38] sm:$0xff]
    %v81 = vld [vmem:[%s72 + $0x40] sm:$0xff]
    %v82 = vld [vmem:[%s72 + $0x48] sm:$0xff]
    %v83 = vld [vmem:[%s72 + $0x50] sm:$0xff]
    %v84 = vld [vmem:[%s72 + $0x58] sm:$0xff]
    %v85 = vld [vmem:[%s72 + $0x60] sm:$0xff]
    %v86 = vld [vmem:[%s72 + $0x68] sm:$0xff]
    %v87 = vld [vmem:[%s72 + $0x70] sm:$0xff]
    %v88 = vld [vmem:[%s72 + $0x78] sm:$0xff]
    %s89 = scalar_lea.vmem %s2, 1
    %v90 = vld [vmem:[%s89] sm:$0x1]
    %v92 = vperm.slane %v90, 0
    %94 = vmatpush.msra.mxu0 %v88
    %95 = vmatpush.msra.mxu0 %v87
    %96 = vmatpush.msra.mxu0 %v86
    %97 = vmatpush.msra.mxu0 %v85
    %98 = vmatpush.msra.mxu0 %v84
    %99 = vmatpush.msra.mxu0 %v83
    %100 = vmatpush.msra.mxu0 %v82
    %101 = vmatpush.msra.mxu0 %v81
    %102 = vmatpush.msra.mxu0 %v80
    %103 = vmatpush.msra.mxu0 %v79
    %104 = vmatpush.msra.mxu0 %v78
    %105 = vmatpush.msra.mxu0 %v77
    %106 = vmatpush.msra.mxu0 %v76
    %107 = vmatpush.msra.mxu0 %v75
    %108 = vmatpush.msra.mxu0 %v74
    %109 = vmatpush.msra.mxu0 %v73
    %110 = vmatmul.f32.gmra.mxu0 %v71
    %v111 = vpop.f32.mrf.mxu0
    %v112 = vadd.f32 %v92, %v111
    %113 = vdwg.mxu0
    %v114 = vmax.f32 %v112, 0.0
    %s115 = scalar_lea.vmem [#allocation2], 256
    %v116 = vld [vmem:[%s115] sm:$0xff]
    %v117 = vld [vmem:[%s115 + $0x8] sm:$0xff]
    %v118 = vld [vmem:[%s115 + $0x10] sm:$0xff]
    %v119 = vld [vmem:[%s115 + $0x18] sm:$0xff]
    %v120 = vld [vmem:[%s115 + $0x20] sm:$0xff]
    %v121 = vld [vmem:[%s115 + $0x28] sm:$0xff]
    %v122 = vld [vmem:[%s115 + $0x30] sm:$0xff]
    %v123 = vld [vmem:[%s115 + $0x38] sm:$0xff]
    %v124 = vld [vmem:[%s115 + $0x40] sm:$0xff]
    %v125 = vld [vmem:[%s115 + $0x48] sm:$0xff]
    %v126 = vld [vmem:[%s115 + $0x50] sm:$0xff]
    %v127 = vld [vmem:[%s115 + $0x58] sm:$0xff]
    %v128 = vld [vmem:[%s115 + $0x60] sm:$0xff]
    %v129 = vld [vmem:[%s115 + $0x68] sm:$0xff]
    %v130 = vld [vmem:[%s115 + $0x70] sm:$0xff]
    %v131 = vld [vmem:[%s115 + $0x78] sm:$0xff]
    %s132 = scalar_lea.vmem %s2, 2
    %v133 = vld [vmem:[%s132] sm:$0x1]
    %v135 = vperm.slane %v133, 0
    %137 = vmatpush.msra.mxu0 %v131
    %138 = vmatpush.msra.mxu0 %v130
    %139 = vmatpush.msra.mxu0 %v129
    %140 = vmatpush.msra.mxu0 %v128
    %141 = vmatpush.msra.mxu0 %v127
    %142 = vmatpush.msra.mxu0 %v126
    %143 = vmatpush.msra.mxu0 %v125
    %144 = vmatpush.msra.mxu0 %v124
    %145 = vmatpush.msra.mxu0 %v123
    %146 = vmatpush.msra.mxu0 %v122
    %147 = vmatpush.msra.mxu0 %v121
    %148 = vmatpush.msra.mxu0 %v120
    %149 = vmatpush.msra.mxu0 %v119
    %150 = vmatpush.msra.mxu0 %v118
    %151 = vmatpush.msra.mxu0 %v117
    %152 = vmatpush.msra.mxu0 %v116
    %153 = vmatmul.f32.gmra.mxu0 %v114
    %v154 = vpop.f32.mrf.mxu0
    %v155 = vadd.f32 %v135, %v154
    %156 = vdwg.mxu0
    %v157 = vmax.f32 %v155, 0.0
    %s158 = scalar_lea.vmem [#allocation2], 384
    %v159 = vld [vmem:[%s158] sm:$0xff]
    %v160 = vld [vmem:[%s158 + $0x8] sm:$0xff]
    %v161 = vld [vmem:[%s158 + $0x10] sm:$0xff]
    %v162 = vld [vmem:[%s158 + $0x18] sm:$0xff]
    %v163 = vld [vmem:[%s158 + $0x20] sm:$0xff]
    %v164 = vld [vmem:[%s158 + $0x28] sm:$0xff]
    %v165 = vld [vmem:[%s158 + $0x30] sm:$0xff]
    %v166 = vld [vmem:[%s158 + $0x38] sm:$0xff]
    %v167 = vld [vmem:[%s158 + $0x40] sm:$0xff]
    %v168 = vld [vmem:[%s158 + $0x48] sm:$0xff]
    %v169 = vld [vmem:[%s158 + $0x50] sm:$0xff]
    %v170 = vld [vmem:[%s158 + $0x58] sm:$0xff]
    %v171 = vld [vmem:[%s158 + $0x60] sm:$0xff]
    %v172 = vld [vmem:[%s158 + $0x68] sm:$0xff]
    %v173 = vld [vmem:[%s158 + $0x70] sm:$0xff]
    %v174 = vld [vmem:[%s158 + $0x78] sm:$0xff]
    %s175 = scalar_lea.vmem %s2, 3
    %v176 = vld [vmem:[%s175] sm:$0x1]
    %v178 = vperm.slane %v176, 0
    %180 = vmatpush.msra.mxu0 %v174
    %181 = vmatpush.msra.mxu0 %v173
    %182 = vmatpush.msra.mxu0 %v172
    %183 = vmatpush.msra.mxu0 %v171
    %184 = vmatpush.msra.mxu0 %v170
    %185 = vmatpush.msra.mxu0 %v169
    %186 = vmatpush.msra.mxu0 %v168
    %187 = vmatpush.msra.mxu0 %v167
    %188 = vmatpush.msra.mxu0 %v166
    %189 = vmatpush.msra.mxu0 %v165
    %190 = vmatpush.msra.mxu0 %v164
    %191 = vmatpush.msra.mxu0 %v163
    %192 = vmatpush.msra.mxu0 %v162
    %193 = vmatpush.msra.mxu0 %v161
    %194 = vmatpush.msra.mxu0 %v160
    %195 = vmatpush.msra.mxu0 %v159
    %196 = vmatmul.f32.gmra.mxu0 %v157
    %v197 = vpop.f32.mrf.mxu0
    %v198 = vadd.f32 %v178, %v197
    %199 = vdwg.mxu0
    %200 = vst [vmem:[%s3] sm:$0xff] %v198
    // Predicated region
    $region18: #{neuro_missile_net_forward.1} parent=1 // pred_check
      _
    $region19: #{neuro_missile_net_forward.1} parent=1 // pred_check_branch
      %202 = sbr.rel (0) target = $region21
    $region20: #{neuro_missile_net_forward.1} parent=1 // pred_region
      _
    $region21: #{neuro_missile_net_forward.1} parent=1 // pred_fallthru
      _
    // Predicated region
    $region22: #{neuro_missile_net_forward.1} parent=1 // pred_check
      _
    $region23: #{neuro_missile_net_forward.1} parent=1 // pred_check_branch
      %204 = sbr.rel (0) target = $region25
    $region24: #{neuro_missile_net_forward.1} parent=1 // pred_region
      _
    $region25: #{neuro_missile_net_forward.1} parent=1 // pred_fallthru
      _
    %205 = vsyncpa [#allocation3], 1

</llo_original>
